<compile_context>
chip_gen: v7x
topology: tpu7x:2x2x1
jax: 0.10.0
libtpu: 0.0.40
codegen_flags: <defaults>
</compile_context>

<pallas_src>
import functools
import math

import jax
import jax.numpy as jnp
from jax.experimental import pallas as pl
from jax.experimental.pallas import tpu as pltpu


def get_padding_elem(L_in: int, stride: int, kernel_size: int, dilation: int):
    """Exact port of the module's padding helper."""
    if stride > 1:
        padding = [math.floor(kernel_size / 2), math.floor(kernel_size / 2)]
    else:
        L_out = math.floor((L_in - dilation * (kernel_size - 1) - 1) / stride) + 1
        padding = [math.floor((L_in - L_out) / 2), math.floor((L_in - L_out) / 2)]
    return padding


def _round_up(x: int, m: int) -> int:
    return ((x + m - 1) // m) * m


def _conv1d_kernel(x_ref, h_ref, w_ref, b_ref, o_ref, xw_ref, *,
                   kernel_size, dilation, t_tile, halo, c_in, fold_taps):
    # x_ref : (1, T_tile, C_in)       current time tile (channels-last)
    # h_ref : (1, 1, hpad, C_in)      first `halo` samples of the *next* tile
    # w_ref : (K*C_in, C_out_tile)    folded weight, rows tap-major / channel-minor
    # b_ref : (1, C_out_tile)         bias
    # o_ref : (1, T_tile, C_out_tile)
    # xw_ref: (T_tile + hpad8, C_in)  VMEM scratch: tile + halo stitched together

    # Stitch the tile and its halo into one contiguous time window.
    xw_ref[0:t_tile, :] = x_ref[0]
    if halo > 0:
        xw_ref[t_tile:t_tile + halo, :] = h_ref[0, 0, 0:halo, :]

    c_out_tile = o_ref.shape[2]

    if fold_taps:
        # Fold the K taps into one matmul: raises the MXU contraction dim from
        # C_in to K*C_in and issues a single matmul per tile.
        pieces = [xw_ref[k * dilation:k * dilation + t_tile, :]
                  for k in range(kernel_size)]
        patch = pieces[0] if kernel_size == 1 else jnp.concatenate(pieces, axis=1)
        acc = jnp.dot(patch, w_ref[...], preferred_element_type=jnp.float32)
    else:
        # Channels already wide enough to feed the MXU per tap.
        acc = jnp.zeros((t_tile, c_out_tile), jnp.float32)
        for k in range(kernel_size):
            s = k * dilation
            acc = acc + jnp.dot(xw_ref[s:s + t_tile, :],
                                w_ref[k * c_in:(k + 1) * c_in, :],
                                preferred_element_type=jnp.float32)

    o_ref[0] = (acc + b_ref[...].astype(jnp.float32)).astype(o_ref.dtype)


def conv1d_forward(x_btc, weight, bias, *, kernel_size, stride=1, dilation=1,
                   padding="same", padding_mode="reflect",
                   time_tile=512, cout_tile=512):
    """Forward pass of the Conv1d module.

    x_btc  : (B, T, C_in)      batch x time x channel (speechbrain convention)
    weight : (C_out, C_in, K)  nn.Conv1d weight layout
    bias   : (C_out,)
    returns: (B, T_out, C_out)
    """
    if stride != 1:
        # TODO(synk): stride > 1 (time decimation) path not implemented in the kernel.
        raise NotImplementedError("only stride=1 (module default) is implemented")
    # TODO(synk): groups > 1 and weight_norm (module non-defaults) are not implemented.

    B, T, C_in = x_btc.shape
    C_out, C_in_w, K = weight.shape
    assert K == kernel_size and C_in_w == C_in

    # ---- time padding (channels-last, pad axis 1), exactly as the module does ----
    if padding == "same":
        assert kernel_size % 2 == 1, "'same' padding requires an odd kernel size"
        # NOTE: module quirk — pad computed with L_in = in_channels; for stride=1 this
        # reduces to floor(dilation*(K-1)/2) per side, so results match nn.Conv1d 'same'.
        pad_l, pad_r = get_padding_elem(C_in, stride, kernel_size, dilation)
        if padding_mode == "reflect":
            assert max(pad_l, pad_r) <= T - 1, "reflect padding requires pad <= T-1"
            x_p = jnp.pad(x_btc, ((0, 0), (pad_l, pad_r), (0, 0)), mode="reflect")
        else:
            x_p = jnp.pad(x_btc, ((0, 0), (pad_l, pad_r), (0, 0)))
    elif padding == "causal":
        num_pad = (kernel_size - 1) * dilation
        x_p = jnp.pad(x_btc, ((0, 0), (num_pad, 0), (0, 0)))
    elif padding == "valid":
        x_p = x_btc
    else:
        raise ValueError("Padding must be 'same', 'valid' or 'causal'. Got " + padding)
    # TODO(synk): the (few-sample) edge padding is still a wrapper jnp.pad; fusing it into
    # the first/last time tiles under pl.when would remove one more small HBM pass.

    T_pad = x_p.shape[1]
    halo = dilation * (kernel_size - 1)
    T_out = T_pad - halo  # stride == 1
    assert T_out >= 1, "input too short for this kernel/dilation"

    # ---- time tiling: VMEM use is O(t_tile), not O(T) ----
    hpad = max(halo, 1)
    hpad8 = _round_up(hpad, 8)
    t_tile = max(8, min(_round_up(time_tile, 8), _round_up(T_out, 8)))
    t_tile = max(t_tile, hpad8)
    n_t = pl.cdiv(T_out, t_tile)
    T_rnd = n_t * t_tile

    # Zero-extend so every (tile, tile + halo) window is in bounds.
    x_ext = jnp.pad(x_p, ((0, 0), (0, T_rnd + t_tile - T_pad), (0, 0)))
    # Small halo side-array: for tile i, the first `hpad` samples of chunk i+1.
    x_halo = x_ext[:, t_tile:, :].reshape(B, n_t, t_tile, C_in)[:, :, :hpad, :]

    # ---- folded weight (rows: tap-major, channel-minor) and 2-D bias ----
    w_fold = jnp.transpose(weight, (2, 1, 0)).reshape(K * C_in, C_out)
    b2 = bias.reshape(1, C_out)

    # ---- C_out tiling (second grid axis) ----
    if C_out <= cout_tile:
        c_tile = C_out
    elif cout_tile % 128 == 0 and C_out % cout_tile == 0:
        c_tile = cout_tile
    elif C_out % 128 == 0:
        c_tile = 128
    else:
        c_tile = C_out
    n_co = C_out // c_tile

    fold_taps = C_in < 128  # fold taps only when the per-tap contraction dim is small

    kernel = functools.partial(
        _conv1d_kernel, kernel_size=K, dilation=dilation, t_tile=t_tile,
        halo=halo, c_in=C_in, fold_taps=fold_taps)

    out = pl.pallas_call(
        kernel,
        out_shape=jax.ShapeDtypeStruct((B, T_rnd, C_out), x_btc.dtype),
        # Time innermost: weight/bias blocks stay resident across it; x re-fetched
        # only n_co (usually 1) times.
        grid=(B, n_co, n_t),
        in_specs=[
            pl.BlockSpec((1, t_tile, C_in), lambda b, co, t: (b, t, 0)),
            pl.BlockSpec((1, 1, hpad, C_in), lambda b, co, t: (b, t, 0, 0)),
            pl.BlockSpec((K * C_in, c_tile), lambda b, co, t: (0, co)),
            pl.BlockSpec((1, c_tile), lambda b, co, t: (0, co)),
        ],
        out_specs=pl.BlockSpec((1, t_tile, c_tile), lambda b, co, t: (b, t, co)),
        scratch_shapes=[pltpu.VMEM((t_tile + hpad8, C_in), x_btc.dtype)],
        compiler_params=pltpu.CompilerParams(
            dimension_semantics=("parallel", "parallel", "parallel"),
            vmem_limit_bytes=48 * 1024 * 1024,
        ),
    )(x_ext, x_halo, w_fold, b2)

    if T_rnd != T_out:
        out = out[:, :T_out, :]
    return out


def _reference(x, weight, bias, *, kernel_size, dilation=1):
    """Pure-JAX channels-last reference with the module's reflect 'same' padding."""
    C_in = x.shape[-1]
    pad_l, pad_r = get_padding_elem(C_in, 1, kernel_size, dilation)
    x_pad = jnp.pad(x, ((0, 0), (pad_l, pad_r), (0, 0)), mode="reflect")
    out = jax.lax.conv_general_dilated(
        x_pad, jnp.transpose(weight, (2, 1, 0)),
        window_strides=(1,), padding="VALID", rhs_dilation=(dilation,),
        dimension_numbers=("NWC", "WIO", "NWC"))
    return out + bias[None, None, :]


def _init_conv(key, c_out, c_in, k):
    """Deterministic init mimicking nn.Conv1d's default uniform(-bound, bound)."""
    kw, kb = jax.random.split(key)
    bound = 1.0 / math.sqrt(c_in * k)
    weight = jax.random.uniform(kw, (c_out, c_in, k), jnp.float32, -bound, bound)
    bias = jax.random.uniform(kb, (c_out,), jnp.float32, -bound, bound)
    return weight, bias


if __name__ == "__main__":
    key = jax.random.PRNGKey(0)
    k1, k2, k3, k4 = jax.random.split(key, 4)

    # --- check 1: small default config (B=2, T=16, C_in=8, C_out=16, K=3), one tile ---
    B, T, C_IN, C_OUT, K = 2, 16, 8, 16, 3
    x = jax.random.normal(k1, (B, T, C_IN), dtype=jnp.float32)
    weight, bias = _init_conv(k2, C_OUT, C_IN, K)

    out = conv1d_forward(x, weight, bias, kernel_size=K)
    out = jax.block_until_ready(out)
    ref = _reference(x, weight, bias, kernel_size=K)
    assert out.shape == (B, T, C_OUT), out.shape
    assert jnp.allclose(out, ref, atol=1e-5, rtol=1e-5), \
        float(jnp.max(jnp.abs(out - ref)))

    # --- check 2: longer sequence, multiple time tiles + dilation (exercises the halo) ---
    T2, DIL = 40, 2
    x2 = jax.random.normal(k3, (B, T2, C_IN), dtype=jnp.float32)
    out2 = conv1d_forward(x2, weight, bias, kernel_size=K, dilation=DIL, time_tile=16)
    out2 = jax.block_until_ready(out2)
    ref2 = _reference(x2, weight, bias, kernel_size=K, dilation=DIL)
    assert out2.shape == (B, T2, C_OUT), out2.shape
    assert jnp.allclose(out2, ref2, atol=1e-5, rtol=1e-5), \
        float(jnp.max(jnp.abs(out2 - ref2)))

    # --- check 3: wide channels (C_in=128) -> per-tap matmul path, multiple time tiles ---
    B3, T3, C_IN3, C_OUT3 = 1, 24, 128, 128
    x3 = jax.random.normal(k4, (B3, T3, C_IN3), dtype=jnp.float32)
    weight3, bias3 = _init_conv(jax.random.PRNGKey(7), C_OUT3, C_IN3, K)
    out3 = conv1d_forward(x3, weight3, bias3, kernel_size=K, time_tile=16)
    out3 = jax.block_until_ready(out3)
    ref3 = _reference(x3, weight3, bias3, kernel_size=K)
    assert out3.shape == (B3, T3, C_OUT3), out3.shape
    assert jnp.allclose(out3, ref3, atol=1e-4, rtol=1e-4), \
        float(jnp.max(jnp.abs(out3 - ref3)))

    print("KERNEL_OK")
</pallas_src>

<mosaic_0001>
module attributes {stable_mosaic.version = 11 : i64} {
  func.func @_conv1d_kernel(%arg0: i32, %arg1: i32, %arg2: i32, %arg3: memref<1x16x8xf32, #tpu.memory_space<vmem>>, %arg4: memref<1x1x2x8xf32, #tpu.memory_space<vmem>>, %arg5: memref<24x16xf32, #tpu.memory_space<vmem>>, %arg6: memref<1x16xf32, #tpu.memory_space<vmem>>, %arg7: memref<1x16x16xf32, #tpu.memory_space<vmem>>, %arg8: memref<24x8xf32, #tpu.memory_space<vmem>>) attributes {dimension_semantics = [#tpu.dimension_semantics<parallel>, #tpu.dimension_semantics<parallel>, #tpu.dimension_semantics<parallel>], iteration_bounds = array<i64: 2, 1, 1>, scalar_prefetch = 0 : i64, scratch_operands = 1 : i64, tpu.core_type = #tpu.core_type<tc>, window_params = [{transform_indices = @transform_0, window_bounds = array<i64: 1, 16, 8>}, {transform_indices = @transform_1, window_bounds = array<i64: 1, 1, 2, 8>}, {transform_indices = @transform_2, window_bounds = array<i64: 24, 16>}, {transform_indices = @transform_3, window_bounds = array<i64: 1, 16>}, {transform_indices = @transform_4, window_bounds = array<i64: 1, 16, 16>}]} {
    %c0 = arith.constant 0 : index
    %c0_0 = arith.constant 0 : index
    %c0_1 = arith.constant 0 : index
    %0 = vector.load %arg3[%c0, %c0_0, %c0_1] : memref<1x16x8xf32, #tpu.memory_space<vmem>>, vector<1x16x8xf32>
    %1 = vector.shape_cast %0 : vector<1x16x8xf32> to vector<16x8xf32>
    %c0_2 = arith.constant 0 : index
    %c0_3 = arith.constant 0 : index
    %2 = vector.load %arg8[%c0_2, %c0_3] : memref<24x8xf32, #tpu.memory_space<vmem>>, vector<16x8xf32>
    tpu.vector_store %arg8[%c0_2, %c0_3], %1 {strides = array<i32>} : memref<24x8xf32, #tpu.memory_space<vmem>>, vector<16x8xf32>,
    %c0_4 = arith.constant 0 : index
    %c0_5 = arith.constant 0 : index
    %c0_6 = arith.constant 0 : index
    %c0_7 = arith.constant 0 : index
    %3 = vector.load %arg4[%c0_4, %c0_5, %c0_6, %c0_7] : memref<1x1x2x8xf32, #tpu.memory_space<vmem>>, vector<1x1x2x8xf32>
    %4 = vector.shape_cast %3 : vector<1x1x2x8xf32> to vector<2x8xf32>
    %c16 = arith.constant 16 : index
    %c0_8 = arith.constant 0 : index
    %5 = vector.load %arg8[%c16, %c0_8] : memref<24x8xf32, #tpu.memory_space<vmem>>, vector<2x8xf32>
    tpu.vector_store %arg8[%c16, %c0_8], %4 {strides = array<i32>} : memref<24x8xf32, #tpu.memory_space<vmem>>, vector<2x8xf32>,
    %c0_9 = arith.constant 0 : index
    %c0_10 = arith.constant 0 : index
    %6 = vector.load %arg8[%c0_9, %c0_10] : memref<24x8xf32, #tpu.memory_space<vmem>>, vector<16x8xf32>
    %c1 = arith.constant 1 : index
    %c0_11 = arith.constant 0 : index
    %7 = vector.load %arg8[%c1, %c0_11] : memref<24x8xf32, #tpu.memory_space<vmem>>, vector<16x8xf32>
    %c2 = arith.constant 2 : index
    %c0_12 = arith.constant 0 : index
    %8 = vector.load %arg8[%c2, %c0_12] : memref<24x8xf32, #tpu.memory_space<vmem>>, vector<16x8xf32>
    %9 = tpu.concatenate %6, %7, %8 in 1 : vector<16x8xf32>, vector<16x8xf32>, vector<16x8xf32> -> vector<16x24xf32>
    %c0_13 = arith.constant 0 : index
    %c0_14 = arith.constant 0 : index
    %10 = vector.load %arg5[%c0_13, %c0_14] : memref<24x16xf32, #tpu.memory_space<vmem>>, vector<24x16xf32>
    %cst = arith.constant dense<0.000000e+00> : vector<16x16xf32>
    %11 = tpu.matmul %9, %10, %cst {dimension_numbers = #tpu.dot_dimension_numbers<[1], [0], [0], [1], [0, 0, 1, 1], [], []>} : vector<16x24xf32>, vector<24x16xf32>, vector<16x16xf32> -> vector<16x16xf32>
    %c0_15 = arith.constant 0 : index
    %c0_16 = arith.constant 0 : index
    %12 = vector.load %arg6[%c0_15, %c0_16] : memref<1x16xf32, #tpu.memory_space<vmem>>, vector<1x16xf32>
    %13 = vector.broadcast %12 : vector<1x16xf32> to vector<16x16xf32>
    %14 = arith.addf %11, %13 : vector<16x16xf32>
    %c0_17 = arith.constant 0 : index
    %c0_18 = arith.constant 0 : index
    %c0_19 = arith.constant 0 : index
    %15 = vector.load %arg7[%c0_17, %c0_18, %c0_19] : memref<1x16x16xf32, #tpu.memory_space<vmem>>, vector<1x16x16xf32>
    %16 = vector.shape_cast %15 : vector<1x16x16xf32> to vector<16x16xf32>
    %17 = vector.shape_cast %14 : vector<16x16xf32> to vector<1x16x16xf32>
    tpu.vector_store %arg7[%c0_17, %c0_18, %c0_19], %17 {strides = array<i32>} : memref<1x16x16xf32, #tpu.memory_space<vmem>>, vector<1x16x16xf32>,
    return
  }
  func.func @transform_0(%arg0: i32, %arg1: i32, %arg2: i32) -> (i32, i32, i32) {
    %c0_i32 = arith.constant 0 : i32
    %c0_i32_0 = arith.constant 0 : i32
    return %arg0, %arg2, %c0_i32 : i32, i32, i32
  }
  func.func @transform_1(%arg0: i32, %arg1: i32, %arg2: i32) -> (i32, i32, i32, i32) {
    %c0_i32 = arith.constant 0 : i32
    %c0_i32_0 = arith.constant 0 : i32
    %c0_i32_1 = arith.constant 0 : i32
    return %arg0, %arg2, %c0_i32, %c0_i32_0 : i32, i32, i32, i32
  }
  func.func @transform_2(%arg0: i32, %arg1: i32, %arg2: i32) -> (i32, i32) {
    %c0_i32 = arith.constant 0 : i32
    %c0_i32_0 = arith.constant 0 : i32
    return %c0_i32, %arg1 : i32, i32
  }
  func.func @transform_3(%arg0: i32, %arg1: i32, %arg2: i32) -> (i32, i32) {
    %c0_i32 = arith.constant 0 : i32
    %c0_i32_0 = arith.constant 0 : i32
    return %c0_i32, %arg1 : i32, i32
  }
  func.func @transform_4(%arg0: i32, %arg1: i32, %arg2: i32) -> (i32, i32, i32) {
    %c0_i32 = arith.constant 0 : i32
    return %arg0, %arg2, %arg1 : i32, i32, i32
  }
}

</mosaic_0001>

<llo_original>
// kernel: tpu_custom_call.1
$region0: #{tpu_custom_call.1}
  #allocation0 [shape = 'u32[]', space=smem, size = 0x4, offset = 0x4, fixed_abs, tag = 'smem constant byte address 0x4 - core index']
  #allocation1 [shape = 'u32[144,128]{1,0:T(1,128)}', space=vmem, size = 0x12000, scoped, tag = 'internal scratch']
  #allocation2 [shape = 'f32[24,8]{1,0:T(8,128)}', space=vmem, size = 0x3000, scoped, tag = 'scratch operand']
  %s0 = inlined_call_operand.vmem [shape: f32[2,32,8], index: 0, kind: input, shape index: {}]
  %s1 = inlined_call_operand.vmem [shape: f32[2,1,2,8], index: 1, kind: input, shape index: {}]
  %s2 = inlined_call_operand.vmem [shape: f32[24,16], index: 2, kind: input, shape index: {}]
  %s3 = inlined_call_operand.vmem [shape: f32[1,16], index: 3, kind: input, shape index: {}]
  %s4 = inlined_call_operand.hbm [shape: f32[2,16,16], index: 4, kind: output, shape index: {}]
  %s5 = sld [smem:[#allocation0]]
  $region49: #{tpu_custom_call.1} parent=0
    _
  %s7 = ssub.s32 1, %s5
  %s8 = scalar_select 0, %s7, %s5
  $region1: #{tpu_custom_call.1} parent=0
    #allocation3 [shape = 'u8[16384]{0}', space=vmem, size = 0x4000, scoped, tag = 'output window, operand 0']
    #allocation4 [shape = 's32[2]{0}', space=sflag, size = 0x8, scoped, tag = 'scoped memory for tpu_custom_call.1']
    %9 = vsyncpa [#allocation4], 0
    %s10 = scalar_lea.sflag [#allocation4], 1
    %11 = vsyncpa %s10, 0
    loop: start=0, step=1, limit=4
    $region2: #{tpu_custom_call.1} parent=1 // loop_pre_header
      _
    $region3: #{tpu_custom_call.1} parent=1 // loop_header
      %s13 = sphi 0, %s17
      %p14 = scmp.ge.s32.totalorder %s13, 4
      %s20 = sphi 0, %s39
      %s21 = sphi 0, %s35
      %s22 = sphi 0, %s31
      %s23 = sphi 0, %s20
      %s24 = sphi 0, %s21
      %s25 = sphi 0, %s22
      %s26 = sphi 0, %s23
      %s27 = sphi 0, %s24
      %s28 = sphi 0, %s25
      %s44 = sphi 0, %s46
      %s47 = sphi 0, %s44
      %s48 = sphi 0, %s47
      %s64 = sphi 0, %s48
      %s72 = sphi 0, %s74
      %s75 = sphi 0, %s72
      %s76 = sphi 0, %s75
      %s92 = sphi 0, %s76
      %s98 = sphi 0, %s100
      %s101 = sphi 0, %s98
      %s102 = sphi 0, %s101
      %s118 = sphi 0, %s102
      %s124 = sphi 0, %s126
      %s127 = sphi 0, %s124
      %s128 = sphi 0, %s127
      %s144 = sphi 0, %s128
      %s154 = sphi 0, %s156
      %s157 = sphi 0, %s154
      %s158 = sphi 0, %s157
      %s174 = sphi 0, %s158
    $region4: #{tpu_custom_call.1} parent=1 // loop_header_branch
      %16 = sbr.rel (%p14) target = $region8
    $region5: #{tpu_custom_call.1} parent=1 // loop_body
      %s18 = ssub.s32 %s13, 1
      %s19 = ssub.s32 %s13, 2
      %s29 = sadd.s32 1, %s22
      %p30 = scmp.ge.s32.totalorder %s29, 1
      %s31 = scalar_select %p30, 0, %s29
      %s32 = sadd.s32 1, %s21
      %s33 = scalar_select %p30, %s32, %s21
      %p34 = scmp.ge.s32.totalorder %s33, 1
      %s35 = scalar_select %p34, 0, %s33
      %s36 = sadd.s32 1, %s20
      %s37 = scalar_select %p34, %s36, %s20
      %p38 = scmp.ge.s32.totalorder %s37, 2
      %s39 = scalar_select %p38, 0, %s37
      %s40 = ssub.s32 %s20, %s39
      %s41 = ssub.s32 %s22, %s31
      %s42 = sor.u32 %s40, %s41
      %p43 = scmp.eq.s32.totalorder %s42, 0
      %s45 = sadd.s32 %s44, 1
      %s46 = scalar_select %p43, %s44, %s45
      %p49 = pneg %p43
      %p50 = scmp.eq.s32.totalorder %s13, 1
      %p51 = por %p49, %p50
      %p52 = scmp.ne.s32.totalorder %s44, %s47
      %p53 = scmp.eq.s32.totalorder %s13, 0
      %p54 = por %p52, %p53
      %p55 = scmp.ne.s32.totalorder %s44, %s47
      %p56 = scmp.eq.s32.totalorder %s18, 1
      %p57 = por %p55, %p56
      %p58 = scmp.ne.s32.totalorder %s47, %s48
      %p59 = scmp.eq.s32.totalorder %s18, 0
      %p60 = por %p58, %p59
      %p61 = scmp.ne.s32.totalorder %s47, %s48
      %p62 = scmp.eq.s32.totalorder %s19, 1
      %p63 = por %p61, %p62
      %p65 = scmp.ne.s32.totalorder %s48, %s64
      %p66 = scmp.eq.s32.totalorder %s19, 0
      %p67 = por %p65, %p66
      %s68 = ssub.s32 %s20, %s39
      %s69 = ssub.s32 %s22, %s31
      %s70 = sor.u32 %s68, %s69
      %p71 = scmp.eq.s32.totalorder %s70, 0
      %s73 = sadd.s32 %s72, 1
      %s74 = scalar_select %p71, %s72, %s73
      %p77 = pneg %p71
      %p78 = scmp.eq.s32.totalorder %s13, 1
      %p79 = por %p77, %p78
      %p80 = scmp.ne.s32.totalorder %s72, %s75
      %p81 = scmp.eq.s32.totalorder %s13, 0
      %p82 = por %p80, %p81
      %p83 = scmp.ne.s32.totalorder %s72, %s75
      %p84 = scmp.eq.s32.totalorder %s18, 1
      %p85 = por %p83, %p84
      %p86 = scmp.ne.s32.totalorder %s75, %s76
      %p87 = scmp.eq.s32.totalorder %s18, 0
      %p88 = por %p86, %p87
      %p89 = scmp.ne.s32.totalorder %s75, %s76
      %p90 = scmp.eq.s32.totalorder %s19, 1
      %p91 = por %p89, %p90
      %p93 = scmp.ne.s32.totalorder %s76, %s92
      %p94 = scmp.eq.s32.totalorder %s19, 0
      %p95 = por %p93, %p94
      %s96 = ssub.s32 %s21, %s35
      %p97 = scmp.eq.s32.totalorder %s96, 0
      %s99 = sadd.s32 %s98, 1
      %s100 = scalar_select %p97, %s98, %s99
      %p103 = pneg %p97
      %p104 = scmp.eq.s32.totalorder %s13, 1
      %p105 = por %p103, %p104
      %p106 = scmp.ne.s32.totalorder %s98, %s101
      %p107 = scmp.eq.s32.totalorder %s13, 0
      %p108 = por %p106, %p107
      %p109 = scmp.ne.s32.totalorder %s98, %s101
      %p110 = scmp.eq.s32.totalorder %s18, 1
      %p111 = por %p109, %p110
      %p112 = scmp.ne.s32.totalorder %s101, %s102
      %p113 = scmp.eq.s32.totalorder %s18, 0
      %p114 = por %p112, %p113
      %p115 = scmp.ne.s32.totalorder %s101, %s102
      %p116 = scmp.eq.s32.totalorder %s19, 1
      %p117 = por %p115, %p116
      %p119 = scmp.ne.s32.totalorder %s102, %s118
      %p120 = scmp.eq.s32.totalorder %s19, 0
      %p121 = por %p119, %p120
      %s122 = ssub.s32 %s21, %s35
      %p123 = scmp.eq.s32.totalorder %s122, 0
      %s125 = sadd.s32 %s124, 1
      %s126 = scalar_select %p123, %s124, %s125
      %p129 = pneg %p123
      %p130 = scmp.eq.s32.totalorder %s13, 1
      %p131 = por %p129, %p130
      %p132 = scmp.ne.s32.totalorder %s124, %s127
      %p133 = scmp.eq.s32.totalorder %s13, 0
      %p134 = por %p132, %p133
      %p135 = scmp.ne.s32.totalorder %s124, %s127
      %p136 = scmp.eq.s32.totalorder %s18, 1
      %p137 = por %p135, %p136
      %p138 = scmp.ne.s32.totalorder %s127, %s128
      %p139 = scmp.eq.s32.totalorder %s18, 0
      %p140 = por %p138, %p139
      %p141 = scmp.ne.s32.totalorder %s127, %s128
      %p142 = scmp.eq.s32.totalorder %s19, 1
      %p143 = por %p141, %p142
      %p145 = scmp.ne.s32.totalorder %s128, %s144
      %p146 = scmp.eq.s32.totalorder %s19, 0
      %p147 = por %p145, %p146
      %s148 = ssub.s32 %s20, %s39
      %s149 = ssub.s32 %s22, %s31
      %s150 = sor.u32 %s148, %s149
      %s151 = ssub.s32 %s21, %s35
      %s152 = sor.u32 %s150, %s151
      %p153 = scmp.eq.s32.totalorder %s152, 0
      %s155 = sadd.s32 %s154, 1
      %s156 = scalar_select %p153, %s154, %s155
      %p159 = pneg %p153
      %p160 = scmp.eq.s32.totalorder %s13, 1
      %p161 = por %p159, %p160
      %p162 = scmp.ne.s32.totalorder %s154, %s157
      %p163 = scmp.eq.s32.totalorder %s13, 0
      %p164 = por %p162, %p163
      %p165 = scmp.ne.s32.totalorder %s154, %s157
      %p166 = scmp.eq.s32.totalorder %s18, 1
      %p167 = por %p165, %p166
      %p168 = scmp.ne.s32.totalorder %s157, %s158
      %p169 = scmp.eq.s32.totalorder %s18, 0
      %p170 = por %p168, %p169
      %p171 = scmp.ne.s32.totalorder %s157, %s158
      %p172 = scmp.eq.s32.totalorder %s19, 1
      %p173 = por %p171, %p172
      %p175 = scmp.ne.s32.totalorder %s158, %s174
      %p176 = scmp.eq.s32.totalorder %s19, 0
      %p177 = por %p175, %p176
      %p178 = scmp.le.s32.totalorder 1, %s13
      %p179 = scmp.lt.s32.totalorder %s13, 3
      %p180 = pnand %p178, %p179
      %p181 = pneg %p180
      // Predicated region
      $region9: #{tpu_custom_call.1} parent=5 // pred_check
        _
      $region10: #{tpu_custom_call.1} parent=5 // pred_check_branch
        %183 = sbr.rel (%p180) target = $region12
      $region11: #{tpu_custom_call.1} parent=5 // pred_region
        %s184 = ssub.s32 %s13, 1
        // Predicated region
        $region13: #{tpu_custom_call.1} parent=11 // pred_check
          %p185 = pneg %p114
        $region14: #{tpu_custom_call.1} parent=11 // pred_check_branch
          %187 = sbr.rel (%p185) target = $region16
        $region15: #{tpu_custom_call.1} parent=11 // pred_region
          %p188 = scmp.lt.s32.totalorder %s24, 0
          %s189 = scalar_select %p188, %s24, 0
          %s190 = smul.addr %s189, 8
          %s191 = scalar_lea.vmem %s2, %s190
        $region16: #{tpu_custom_call.1} parent=11 // pred_fallthru
          _
        // Predicated region
        $region17: #{tpu_custom_call.1} parent=11 // pred_check
          %p192 = pneg %p140
        $region18: #{tpu_custom_call.1} parent=11 // pred_check_branch
          %194 = sbr.rel (%p192) target = $region20
        $region19: #{tpu_custom_call.1} parent=11 // pred_region
          %p195 = scmp.lt.s32.totalorder %s24, 0
          %s196 = scalar_select %p195, %s24, 0
          %s197 = scalar_lea.vmem %s3, %s196
        $region20: #{tpu_custom_call.1} parent=11 // pred_fallthru
          _
      $region12: #{tpu_custom_call.1} parent=5 // pred_fallthru
        _
      %p198 = scmp.lt.s32.totalorder %s13, 2
      // Predicated region
      $region21: #{tpu_custom_call.1} parent=5 // pred_check
        %p199 = pneg %p198
      $region22: #{tpu_custom_call.1} parent=5 // pred_check_branch
        %201 = sbr.rel (%p199) target = $region24
      $region23: #{tpu_custom_call.1} parent=5 // pred_region
        // Predicated region
        $region25: #{tpu_custom_call.1} parent=23 // pred_check
          %p202 = pneg %p54
        $region26: #{tpu_custom_call.1} parent=23 // pred_check_branch
          %204 = sbr.rel (%p202) target = $region28
        $region27: #{tpu_custom_call.1} parent=23 // pred_region
          %s205 = smul.u32 2, %s22
          %p206 = scmp.lt.s32.totalorder %s20, 1
          %s207 = scalar_select %p206, %s20, 1
          %p208 = scmp.lt.s32.totalorder %s205, 3
          %s209 = scalar_select %p208, %s205, 3
          %s210 = smul.addr %s207, 4
          %s211 = sadd.s32 %s209, %s210
          %s212 = smul.addr %s211, 8
          %s213 = scalar_lea.vmem %s0, %s212
          %s214 = smul.u32 2, %s22
        $region28: #{tpu_custom_call.1} parent=23 // pred_fallthru
          _
        // Predicated region
        $region29: #{tpu_custom_call.1} parent=23 // pred_check
          %p215 = pneg %p82
        $region30: #{tpu_custom_call.1} parent=23 // pred_check_branch
          %217 = sbr.rel (%p215) target = $region32
        $region31: #{tpu_custom_call.1} parent=23 // pred_region
          %p218 = scmp.lt.s32.totalorder %s20, 1
          %s219 = scalar_select %p218, %s20, 1
          %p220 = scmp.lt.s32.totalorder %s22, 0
          %s221 = scalar_select %p220, %s22, 0
          %s222 = sadd.s32 %s221, %s219
          %s223 = smul.addr %s222, 2
          %s224 = scalar_lea.vmem %s1, %s223
        $region32: #{tpu_custom_call.1} parent=23 // pred_fallthru
          _
      $region24: #{tpu_custom_call.1} parent=5 // pred_fallthru
        _
      %p225 = scmp.le.s32.totalorder 1, %s13
      %p226 = scmp.lt.s32.totalorder %s13, 3
      %p227 = pnand %p225, %p226
      %p228 = pneg %p227
      // Predicated region
      $region33: #{tpu_custom_call.1} parent=5 // pred_check
        _
      $region34: #{tpu_custom_call.1} parent=5 // pred_check_branch
        %230 = sbr.rel (%p227) target = $region36
      $region35: #{tpu_custom_call.1} parent=5 // pred_region
        %s231 = ssub.s32 %s13, 1
        %s232 = smul.u32 2, %s25
        %p233 = scmp.lt.s32.totalorder %s23, 1
        %s234 = scalar_select %p233, %s23, 1
        %p235 = scmp.lt.s32.totalorder %s232, 3
        %s236 = scalar_select %p235, %s232, 3
        %s237 = smul.addr %s234, 4
        %s238 = sadd.s32 %s236, %s237
        %s239 = smul.addr %s238, 8
        %s240 = scalar_lea.vmem %s0, %s239
        %p241 = pneg %p60
        %p242 = pneg %p57
        %p243 = scmp.lt.s32.totalorder %s23, 1
        %s244 = scalar_select %p243, %s23, 1
        %p245 = scmp.lt.s32.totalorder %s25, 0
        %s246 = scalar_select %p245, %s25, 0
        %s247 = sadd.s32 %s246, %s244
        %s248 = smul.addr %s247, 2
        %s249 = scalar_lea.vmem %s1, %s248
        %p250 = pneg %p88
        %p251 = pneg %p85
        %p252 = scmp.lt.s32.totalorder %s24, 0
        %s253 = scalar_select %p252, %s24, 0
        %s254 = smul.addr %s253, 8
        %s255 = scalar_lea.vmem %s2, %s254
        %p256 = pneg %p114
        %p257 = pneg %p111
        %p258 = scmp.lt.s32.totalorder %s24, 0
        %s259 = scalar_select %p258, %s24, 0
        %s260 = scalar_lea.vmem %s3, %s259
        %p261 = pneg %p140
        %p262 = pneg %p137
        %p263 = pneg %p170
        %p264 = pneg %p167
        %s265 = sand.u32 %s157, 1
        %s266 = scalar_lea.sflag [#allocation4], %s265
        %s267 = sand.u32 %s157, 1
        %s268 = smul.addr %s267, 16
        %s269 = scalar_lea.vmem [#allocation3], %s268
        %s270 = smul.u32 2, %s25
        %p271 = scmp.lt.s32.totalorder %s23, 1
        %s272 = scalar_select %p271, %s23, 1
        %p273 = scmp.lt.s32.totalorder %s270, 3
        %s274 = scalar_select %p273, %s270, 3
        %s275 = smul.addr %s272, 4
        %s276 = sadd.s32 %s274, %s275
        %s277 = smul.addr %s276, 8
        %s278 = scalar_lea.vmem %s0, %s277
        %s279 = smul.u32 2, %s25
        %p280 = scmp.lt.s32.totalorder %s23, 1
        %s281 = scalar_select %p280, %s23, 1
        %p282 = scmp.lt.s32.totalorder %s25, 0
        %s283 = scalar_select %p282, %s25, 0
        %s284 = sadd.s32 %s283, %s281
        %s285 = smul.addr %s284, 2
        %s286 = scalar_lea.vmem %s1, %s285
        %p287 = scmp.lt.s32.totalorder %s24, 0
        %s288 = scalar_select %p287, %s24, 0
        %s289 = smul.addr %s288, 8
        %s290 = scalar_lea.vmem %s2, %s289
        %p291 = scmp.lt.s32.totalorder %s24, 0
        %s292 = scalar_select %p291, %s24, 0
        %s293 = scalar_lea.vmem %s3, %s292
        %s294 = smul.u32 2, %s25
        %v295 = vld [vmem:[%s278] sm:$0xff]
        %v296 = vld [vmem:[%s278 + $0x8] sm:$0xff]
        %vm297 = vcmask 64512
        %298 = vst.msk [vmem:[#allocation2] sm:$0xff] %vm297, %v295
        %299 = vst.msk [vmem:[#allocation2 + $0x8] sm:$0xff] %vm297, %v296
        %v300 = vld [vmem:[%s286] sm:$0x3]
        %vm301 = vcmask 58368
        %302 = vst.msk [vmem:[#allocation2 + $0x10] sm:$0x3] %vm301, %v300
        %v303 = vld [vmem:[#allocation2] sm:$0xff]
        %v304 = vld [vmem:[#allocation2 + $0x8] sm:$0xff]
        %v305 = vld [vmem:[#allocation2 + $0x1] sm:$0xff]
        %v306 = vld [vmem:[#allocation2 + $0x9] sm:$0xff]
        %v307 = vld [vmem:[#allocation2 + $0x2] sm:$0xff]
        %v308 = vld [vmem:[#allocation2 + $0xa] sm:$0xff]
        %311 = vrot.lane.b32.xlu0 %v305, 8
        %v312 = vpop.permute.xlu0 %311
        %313 = vrot.lane.b32.xlu0 %v306, 8
        %v314 = vpop.permute.xlu0 %313
        %319 = vrot.lane.b32.xlu0 %v307, 16
        %v320 = vpop.permute.xlu0 %319
        %321 = vrot.lane.b32.xlu0 %v308, 16
        %v322 = vpop.permute.xlu0 %321
        %v325 = vsel %vm297, %v303, %v312
        %v326 = vsel %vm297, %v304, %v314
        %vm327 = vcmask 130048
        %v328 = vsel %vm327, %v325, %v320
        %v329 = vsel %vm327, %v326, %v322
        %v330 = vld [vmem:[%s290] sm:$0xff]
        %v331 = vld [vmem:[%s290 + $0x8] sm:$0xff]
        %v332 = vld [vmem:[%s290 + $0x10] sm:$0xff]
        %v333 = vld [vmem:[%s293] sm:$0x1]
        %v335 = vlaneseq
        %v336 = vshrl.u32 %v335, 7
        %v337 = vsub.s32 0, %v336
        %v338 = vrot.slane %v333, %v337
        %vm340 = vcmask 195584
        %v342 = vsel %vm340, %v328, 0
        %v345 = vsel %vm340, %v329, 0
        %347 = vmatprep.subr.mxu0 0.0
        %348 = vmatpush1.msra.mxu0 %v330
        %349 = vmatprep.subr.mxu0 0.0
        %350 = vmatpush1.msra.mxu0 %v331
        %351 = vmatprep.subr.mxu0 0.0
        %352 = vmatpush1.msra.mxu0 %v332
        %353 = vmatprep.subr.mxu0 0.0
        %354 = vmatpush1.msra.mxu0 0.0
        %355 = vmatprep.subr.mxu0 0.0
        %356 = vmatpush1.msra.mxu0 0.0
        %357 = vmatprep.subr.mxu0 0.0
        %358 = vmatpush1.msra.mxu0 0.0
        %359 = vmatprep.subr.mxu0 0.0
        %360 = vmatpush1.msra.mxu0 0.0
        %361 = vmatprep.subr.mxu0 0.0
        %362 = vmatpush1.msra.mxu0 0.0
        %363 = vmatprep.subr.mxu0 0.0
        %364 = vmatpush1.msra.mxu0 0.0
        %365 = vmatprep.subr.mxu0 0.0
        %366 = vmatpush1.msra.mxu0 0.0
        %367 = vmatprep.subr.mxu0 0.0
        %368 = vmatpush1.msra.mxu0 0.0
        %369 = vmatprep.subr.mxu0 0.0
        %370 = vmatpush1.msra.mxu0 0.0
        %371 = vmatprep.subr.mxu0 0.0
        %372 = vmatpush1.msra.mxu0 0.0
        %373 = vmatprep.subr.mxu0 0.0
        %374 = vmatpush1.msra.mxu0 0.0
        %375 = vmatprep.subr.mxu0 0.0
        %376 = vmatpush1.msra.mxu0 0.0
        %377 = vmatprep.subr.mxu0 0.0
        %378 = vmatpush1.msra.mxu0 0.0
        %379 = vmatprep.subr.mxu0 0.0
        %380 = vmatpush1.msra.mxu0 0.0
        %381 = vmatprep.subr.mxu0 0.0
        %382 = vmatpush1.msra.mxu0 0.0
        %383 = vmatprep.subr.mxu0 0.0
        %384 = vmatpush1.msra.mxu0 0.0
        %385 = vmatprep.subr.mxu0 0.0
        %386 = vmatpush1.msra.mxu0 0.0
        %387 = vmatprep.subr.mxu0 0.0
        %388 = vmatpush1.msra.mxu0 0.0
        %389 = vmatprep.subr.mxu0 0.0
        %390 = vmatpush1.msra.mxu0 0.0
        %391 = vmatprep.subr.mxu0 0.0
        %392 = vmatpush1.msra.mxu0 0.0
        %393 = vmatprep.subr.mxu0 0.0
        %394 = vmatpush1.msra.mxu0 0.0
        %395 = vmatprep.subr.mxu0 0.0
        %396 = vmatpush1.msra.mxu0 0.0
        %397 = vmatprep.subr.mxu0 0.0
        %398 = vmatpush1.msra.mxu0 0.0
        %399 = vmatprep.subr.mxu0 0.0
        %400 = vmatpush1.msra.mxu0 0.0
        %401 = vmatprep.subr.mxu0 0.0
        %402 = vmatpush1.msra.mxu0 0.0
        %403 = vmatprep.subr.mxu0 0.0
        %404 = vmatpush1.msra.mxu0 0.0
        %405 = vmatprep.subr.mxu0 0.0
        %406 = vmatpush1.msra.mxu0 0.0
        %407 = vmatprep.subr.mxu0 0.0
        %408 = vmatpush1.msra.mxu0 0.0
        %409 = vmatprep.subr.mxu0 0.0
        %410 = vmatpush1.msra.mxu0 0.0
        %411 = vmatprep.mubr.f32.mxu0 0.0
        %412 = vmatmul.mubr.f32.gmra.mrb[0].mxu0 %v342
        %v413 = vpop.f32.mrb[0].mxu0
        %v414 = vadd.f32 %v338, %v413
        %v415 = vpop.f32.mrb[0].mxu0
        %416 = vmatprep.mubr.f32.mxu0 0.0
        %417 = vmatmul.mubr.f32.gmra.mrb[0].mxu0 %v345
        %v418 = vpop.f32.mrb[0].mxu0
        %v419 = vadd.f32 %v338, %v418
        %v420 = vpop.f32.mrb[0].mxu0
        %421 = vdwg.mxu0
        %422 = vst.msk [vmem:[%s269] sm:$0xff] %vm327, %v414
        %423 = vst.msk [vmem:[%s269 + $0x8] sm:$0xff] %vm327, %v419
        %s424 = sand.u32 %s157, 1
        %s425 = scalar_lea.sflag [#allocation4], %s424
        %s426 = sand.u32 %s157, 1
        %s427 = smul.addr %s426, 16
        %s428 = scalar_lea.vmem [#allocation3], %s427
        // Predicated region
        $region37: #{tpu_custom_call.1} parent=35 // pred_check
          %p429 = pneg %p167
        $region38: #{tpu_custom_call.1} parent=35 // pred_check_branch
          %431 = sbr.rel (%p429) target = $region40
        $region39: #{tpu_custom_call.1} parent=35 // pred_region
          %s432 = smul.u32 2, %s25
          %s434 = ssub.s32 256, 256
          %435 = vsyncadd %s425, %s434
          %s436 = sadd.s32 %s24, %s432
          %s437 = smul.addr %s23, 2
          %s438 = sadd.s32 %s436, %s437
          %s439 = smul.addr %s438, 128
          %s440 = scalar_lea.hbm %s4, %s439
          %s441 = sshll.u32 %s428, 4
          %s442 = int_to_ptr.vmem [resolvable:$true] %s441
          %447 = dma.vmem_to_hbm [thread:$0]  %s442, 256, %s440, %s425, 128, 128, 8
        $region40: #{tpu_custom_call.1} parent=35 // pred_fallthru
          _
      $region36: #{tpu_custom_call.1} parent=5 // pred_fallthru
        _
      %p448 = scmp.le.s32.totalorder 2, %s13
      // Predicated region
      $region41: #{tpu_custom_call.1} parent=5 // pred_check
        %p449 = pneg %p448
      $region42: #{tpu_custom_call.1} parent=5 // pred_check_branch
        %451 = sbr.rel (%p449) target = $region44
      $region43: #{tpu_custom_call.1} parent=5 // pred_region
        %s452 = ssub.s32 %s13, 2
        // Predicated region
        $region45: #{tpu_custom_call.1} parent=43 // pred_check
          %p453 = pneg %p173
        $region46: #{tpu_custom_call.1} parent=43 // pred_check_branch
          %455 = sbr.rel (%p453) target = $region48
        $region47: #{tpu_custom_call.1} parent=43 // pred_region
          %s456 = sand.u32 %s158, 1
          %s457 = scalar_lea.sflag [#allocation4], %s456
          %s458 = sand.u32 %s158, 1
          %s459 = smul.addr %s458, 16
          %s460 = scalar_lea.vmem [#allocation3], %s459
          %461 = dma.done %s457, 256
        $region48: #{tpu_custom_call.1} parent=43 // pred_fallthru
          _
      $region44: #{tpu_custom_call.1} parent=5 // pred_fallthru
        _
    $region6: #{tpu_custom_call.1} parent=1 // loop_footer
      %s17 = sadd.s32 1, %s13
    $region7: #{tpu_custom_call.1} parent=1 // loop_footer_branch
      %12 = sbr.rel target = $region3
    $region8: #{tpu_custom_call.1} parent=1 // loop_exit
      _
    %462 = vsyncpa [#allocation4], 1
    %s463 = scalar_lea.sflag [#allocation4], 1
    %464 = vsyncpa %s463, 1

</llo_original>
